<compile_context>
chip_gen: v7x
topology: tpu7x:2x2x1
jax: 0.10.0
libtpu: 0.0.40
codegen_flags: <defaults>
</compile_context>

<pallas_src>
import functools
import math

import jax
import jax.numpy as jnp
from jax.experimental import pallas as pl
from jax.experimental.pallas import tpu as pltpu


def ea_kernel(x_ref, w01_ref, wout_ref, bout_ref, o_ref, *, eps_attn):
    """One batch tile. Activations are [c_or_k, n] per batch element, n = h*w on lanes."""
    w01 = w01_ref[...]      # [k, c]   fused conv1 + linear_0 weight
    wout = wout_ref[...]    # [c, k]   fused linear_1 + conv2(+BN) weight
    bout = bout_ref[...]    # [c, 1]   fused conv2(+BN) bias

    bt = x_ref.shape[0]
    for bi in range(bt):    # static unroll over the batch tile
        # fused conv1 + linear_0 (conv1 bias cancels exactly in the softmax over n)
        attn = jnp.dot(w01, x_ref[bi], preferred_element_type=jnp.float32)     # [k, n]

        # softmax over the spatial (lane) dim n — denominator >= 1, approx recip is safe
        attn = jnp.exp(attn - jnp.max(attn, axis=-1, keepdims=True))
        attn = attn * pl.reciprocal(jnp.sum(attn, axis=-1, keepdims=True), approx=True)

        # double-normalization over the k (sublane) dim — exact divide (denominator can be tiny)
        attn = attn / (eps_attn + jnp.sum(attn, axis=0, keepdims=True))

        # fused linear_1 + conv2 (eval-mode BN folded): z = Wout @ attn + bout
        z = jnp.dot(wout, attn, preferred_element_type=jnp.float32) + bout     # [c, n]

        # residual (re-read x: short live range) + ReLU, lane-dense store
        o_ref[bi] = jnp.maximum(z + x_ref[bi], 0.0).astype(o_ref.dtype)


def _pick_b_tile(b):
    """Largest divisor of b giving a grid of >= 2 equal steps (v7x: both TCs busy;
    v5e/v6e: amortizes per-grid-step overhead)."""
    if b <= 1:
        return 1
    for d in range(b // 2, 0, -1):
        if b % d == 0:
            return d
    return 1


def external_attention(x, wc1, bc1, w0, wc2, bn_gamma, bn_beta, bn_mean, bn_var,
                       *, eps_bn=1e-5, eps_attn=1e-9, b_tile=None):
    """x: [b, c, h, w] NCHW.  wc1: [c, c], bc1: [c], w0: [k, c], wc2: [c, c], bn_*: [c].

    bc1 is accepted for API parity with the PyTorch module but is dropped: W0 @ bc1
    is constant along the softmax axis and cancels exactly.
    """
    del bc1  # exact algebraic cancellation in softmax (see header comment)

    b, c, h, w = x.shape
    n = h * w
    k = w0.shape[0]

    # NCHW -> [b, c, n]: pure reshape, no transpose / extra HBM pass.
    xf = x.reshape(b, c, n)

    f32 = jnp.float32
    hi = jax.lax.Precision.HIGHEST

    # Fold eval-mode BatchNorm into conv2 (mathematically exact for inference).
    scale = (bn_gamma.astype(f32) / jnp.sqrt(bn_var.astype(f32) + eps_bn))      # [c]
    wc2_eff = wc2.astype(f32) * scale[:, None]                                   # [c, c]
    bc2_eff = bn_beta.astype(f32) - bn_mean.astype(f32) * scale                  # [c]

    # Fold conv1 into linear_0, and conv2(+BN) into linear_1 (weight tie W1 = W0^T).
    w01 = jnp.dot(w0.astype(f32), wc1.astype(f32), precision=hi)                 # [k, c]
    w_out = jnp.dot(wc2_eff, w0.astype(f32).T, precision=hi)                     # [c, k]
    b_out = bc2_eff.reshape(c, 1)                                                # [c, 1]

    if b_tile is None:
        b_tile = _pick_b_tile(b)
    assert b % b_tile == 0, "b_tile must divide the batch size"
    grid = (b // b_tile,)

    kernel = functools.partial(ea_kernel, eps_attn=eps_attn)

    out = pl.pallas_call(
        kernel,
        out_shape=jax.ShapeDtypeStruct((b, c, n), x.dtype),
        grid=grid,
        in_specs=[
            pl.BlockSpec((b_tile, c, n), lambda i: (i, 0, 0)),   # x, one batch tile per step
            pl.BlockSpec((k, c), lambda i: (0, 0)),               # fused conv1+linear_0 weight
            pl.BlockSpec((c, k), lambda i: (0, 0)),               # fused linear_1+conv2 weight
            pl.BlockSpec((c, 1), lambda i: (0, 0)),               # fused conv2(+BN) bias
        ],
        out_specs=pl.BlockSpec((b_tile, c, n), lambda i: (i, 0, 0)),
        compiler_params=pltpu.CompilerParams(dimension_semantics=("parallel",)),
    )(xf, w01, w_out, b_out)

    return out.reshape(b, c, h, w)


def external_attention_ref(x, wc1, bc1, w0, wc2, bn_gamma, bn_beta, bn_mean, bn_var,
                           *, eps_bn=1e-5, eps_attn=1e-9):
    """Plain-JAX reference of the PyTorch forward (eval-mode BN), for correctness.

    Note: this reference keeps the conv1 bias and all four separate matmuls, so it
    also validates the host-side weight folds / bias cancellation used by the kernel.
    """
    b, c, h, w = x.shape
    n = h * w
    idn = x
    x1 = jnp.einsum('oc,bchw->bohw', wc1, x) + bc1[None, :, None, None]
    xf = x1.reshape(b, c, n)
    attn = jnp.einsum('kc,bcn->bkn', w0, xf)
    attn = jax.nn.softmax(attn, axis=-1)
    attn = attn / (eps_attn + jnp.sum(attn, axis=1, keepdims=True))
    x2 = jnp.einsum('ck,bkn->bcn', w0.T, attn)
    x3 = jnp.einsum('oc,bcn->bon', wc2, x2)
    scale = bn_gamma / jnp.sqrt(bn_var + eps_bn)
    shift = bn_beta - bn_mean * scale
    x3 = x3 * scale[None, :, None] + shift[None, :, None]
    x3 = x3.reshape(b, c, h, w)
    return jax.nn.relu(x3 + idn)


if __name__ == "__main__":
    # Small shapes consistent with the module: k = 64 is fixed by the module,
    # n = h*w = 256 keeps the lane dim dense (multiple of 128).
    b, c, h, w = 2, 32, 16, 16
    k = 64

    key = jax.random.PRNGKey(0)
    kx, k1, kb1, k0, k2, kg, kbeta, kmean, kvar = jax.random.split(key, 9)

    x = jax.random.normal(kx, (b, c, h, w), dtype=jnp.float32)

    # Rough analogue of the module's init (normal(0, sqrt(2/fan)) for the convs).
    wc1 = jax.random.normal(k1, (c, c), jnp.float32) * math.sqrt(2.0 / c)
    bc1 = 0.1 * jax.random.normal(kb1, (c,), jnp.float32)
    w0 = jax.random.normal(k0, (k, c), jnp.float32) * math.sqrt(2.0 / k)
    wc2 = jax.random.normal(k2, (c, c), jnp.float32) * math.sqrt(2.0 / c)

    # Eval-mode SyncBatchNorm parameters (perturbed from the 1/0 init so the
    # BN-fold path is genuinely exercised by the correctness check).
    bn_gamma = 1.0 + 0.1 * jax.random.normal(kg, (c,), jnp.float32)
    bn_beta = 0.1 * jax.random.normal(kbeta, (c,), jnp.float32)
    bn_mean = 0.1 * jax.random.normal(kmean, (c,), jnp.float32)
    bn_var = 1.0 + 0.1 * jax.random.uniform(kvar, (c,), jnp.float32)

    y = external_attention(x, wc1, bc1, w0, wc2, bn_gamma, bn_beta, bn_mean, bn_var)
    jax.block_until_ready(y)

    y_ref = external_attention_ref(x, wc1, bc1, w0, wc2,
                                   bn_gamma, bn_beta, bn_mean, bn_var)
    assert y.shape == (b, c, h, w)
    max_err = float(jnp.max(jnp.abs(y - y_ref)))
    # Tolerance accounts for the EUP approximate reciprocal in the softmax and the
    # reassociated (but exact-in-f32) host-side weight folds.
    assert jnp.allclose(y, y_ref, atol=5e-3, rtol=5e-3), \
        f"mismatch vs JAX reference (max abs err {max_err:.3e})"

    print("KERNEL_OK")
</pallas_src>

<mosaic_0001>
module attributes {stable_mosaic.version = 11 : i64} {
  func.func @ea_kernel(%arg0: i32, %arg1: memref<1x32x256xf32, #tpu.memory_space<vmem>>, %arg2: memref<64x32xf32, #tpu.memory_space<vmem>>, %arg3: memref<32x64xf32, #tpu.memory_space<vmem>>, %arg4: memref<32x1xf32, #tpu.memory_space<vmem>>, %arg5: memref<1x32x256xf32, #tpu.memory_space<vmem>>) attributes {dimension_semantics = [#tpu.dimension_semantics<parallel>], iteration_bounds = array<i64: 2>, scalar_prefetch = 0 : i64, scratch_operands = 0 : i64, tpu.core_type = #tpu.core_type<tc>, window_params = [{transform_indices = @transform_0, window_bounds = array<i64: 1, 32, 256>}, {pipeline_mode = #tpu.pipeline_mode<synchronous>, transform_indices = @transform_1, window_bounds = array<i64: 64, 32>}, {pipeline_mode = #tpu.pipeline_mode<synchronous>, transform_indices = @transform_2, window_bounds = array<i64: 32, 64>}, {pipeline_mode = #tpu.pipeline_mode<synchronous>, transform_indices = @transform_3, window_bounds = array<i64: 32, 1>}, {transform_indices = @transform_4, window_bounds = array<i64: 1, 32, 256>}]} {
    %c0 = arith.constant 0 : index
    %c0_0 = arith.constant 0 : index
    %0 = vector.load %arg2[%c0, %c0_0] : memref<64x32xf32, #tpu.memory_space<vmem>>, vector<64x32xf32>
    %c0_1 = arith.constant 0 : index
    %c0_2 = arith.constant 0 : index
    %1 = vector.load %arg3[%c0_1, %c0_2] : memref<32x64xf32, #tpu.memory_space<vmem>>, vector<32x64xf32>
    %c0_3 = arith.constant 0 : index
    %c0_4 = arith.constant 0 : index
    %2 = vector.load %arg4[%c0_3, %c0_4] : memref<32x1xf32, #tpu.memory_space<vmem>>, vector<32x1xf32>
    %c0_5 = arith.constant 0 : index
    %c0_6 = arith.constant 0 : index
    %c0_7 = arith.constant 0 : index
    %3 = vector.load %arg1[%c0_5, %c0_6, %c0_7] : memref<1x32x256xf32, #tpu.memory_space<vmem>>, vector<1x32x256xf32>
    %4 = vector.shape_cast %3 : vector<1x32x256xf32> to vector<32x256xf32>
    %cst = arith.constant dense<0.000000e+00> : vector<64x256xf32>
    %5 = tpu.matmul %0, %4, %cst {dimension_numbers = #tpu.dot_dimension_numbers<[1], [0], [0], [1], [0, 0, 1, 1], [], []>} : vector<64x32xf32>, vector<32x256xf32>, vector<64x256xf32> -> vector<64x256xf32>
    %cst_8 = arith.constant dense<0xFF800000> : vector<64xf32>
    %6 = vector.multi_reduction <maximumf>, %5, %cst_8 [1] : vector<64x256xf32> to vector<64xf32>
    %7 = vector.shape_cast %6 : vector<64xf32> to vector<64x1xf32>
    %8 = vector.broadcast %7 : vector<64x1xf32> to vector<64x256xf32>
    %9 = arith.subf %5, %8 : vector<64x256xf32>
    %10 = math.exp %9 : vector<64x256xf32>
    %cst_9 = arith.constant dense<0.000000e+00> : vector<64xf32>
    %11 = vector.multi_reduction <add>, %10, %cst_9 [1] : vector<64x256xf32> to vector<64xf32>
    %12 = vector.shape_cast %11 : vector<64xf32> to vector<64x1xf32>
    %13 = tpu.reciprocal %12 {approx = true} : vector<64x1xf32> -> vector<64x1xf32>
    %14 = vector.broadcast %13 : vector<64x1xf32> to vector<64x256xf32>
    %15 = arith.mulf %10, %14 : vector<64x256xf32>
    %cst_10 = arith.constant dense<0.000000e+00> : vector<256xf32>
    %16 = vector.multi_reduction <add>, %15, %cst_10 [0] : vector<64x256xf32> to vector<256xf32>
    %17 = vector.shape_cast %16 : vector<256xf32> to vector<1x256xf32>
    %cst_11 = arith.constant 9.99999971E-10 : f32
    %18 = vector.broadcast %cst_11 : f32 to vector<1x256xf32>
    %19 = arith.addf %18, %17 : vector<1x256xf32>
    %20 = vector.broadcast %19 : vector<1x256xf32> to vector<64x256xf32>
    %21 = arith.divf %15, %20 : vector<64x256xf32>
    %cst_12 = arith.constant dense<0.000000e+00> : vector<32x256xf32>
    %22 = tpu.matmul %1, %21, %cst_12 {dimension_numbers = #tpu.dot_dimension_numbers<[1], [0], [0], [1], [0, 0, 1, 1], [], []>} : vector<32x64xf32>, vector<64x256xf32>, vector<32x256xf32> -> vector<32x256xf32>
    %23 = vector.broadcast %2 : vector<32x1xf32> to vector<32x256xf32>
    %24 = arith.addf %22, %23 : vector<32x256xf32>
    %c0_13 = arith.constant 0 : index
    %c0_14 = arith.constant 0 : index
    %c0_15 = arith.constant 0 : index
    %25 = vector.load %arg1[%c0_13, %c0_14, %c0_15] : memref<1x32x256xf32, #tpu.memory_space<vmem>>, vector<1x32x256xf32>
    %26 = vector.shape_cast %25 : vector<1x32x256xf32> to vector<32x256xf32>
    %27 = arith.addf %24, %26 : vector<32x256xf32>
    %cst_16 = arith.constant 0.000000e+00 : f32
    %28 = vector.broadcast %cst_16 : f32 to vector<32x256xf32>
    %29 = arith.maximumf %27, %28 : vector<32x256xf32>
    %c0_17 = arith.constant 0 : index
    %c0_18 = arith.constant 0 : index
    %c0_19 = arith.constant 0 : index
    %30 = vector.load %arg5[%c0_17, %c0_18, %c0_19] : memref<1x32x256xf32, #tpu.memory_space<vmem>>, vector<1x32x256xf32>
    %31 = vector.shape_cast %30 : vector<1x32x256xf32> to vector<32x256xf32>
    %32 = vector.shape_cast %29 : vector<32x256xf32> to vector<1x32x256xf32>
    tpu.vector_store %arg5[%c0_17, %c0_18, %c0_19], %32 {strides = array<i32>} : memref<1x32x256xf32, #tpu.memory_space<vmem>>, vector<1x32x256xf32>,
    return
  }
  func.func @transform_0(%arg0: i32) -> (i32, i32, i32) {
    %c0_i32 = arith.constant 0 : i32
    %c0_i32_0 = arith.constant 0 : i32
    %c0_i32_1 = arith.constant 0 : i32
    return %arg0, %c0_i32, %c0_i32_0 : i32, i32, i32
  }
  func.func @transform_1(%arg0: i32) -> (i32, i32) {
    %c0_i32 = arith.constant 0 : i32
    %c0_i32_0 = arith.constant 0 : i32
    %c0_i32_1 = arith.constant 0 : i32
    return %c0_i32, %c0_i32_0 : i32, i32
  }
  func.func @transform_2(%arg0: i32) -> (i32, i32) {
    %c0_i32 = arith.constant 0 : i32
    %c0_i32_0 = arith.constant 0 : i32
    %c0_i32_1 = arith.constant 0 : i32
    return %c0_i32, %c0_i32_0 : i32, i32
  }
  func.func @transform_3(%arg0: i32) -> (i32, i32) {
    %c0_i32 = arith.constant 0 : i32
    %c0_i32_0 = arith.constant 0 : i32
    %c0_i32_1 = arith.constant 0 : i32
    return %c0_i32, %c0_i32_0 : i32, i32
  }
  func.func @transform_4(%arg0: i32) -> (i32, i32, i32) {
    %c0_i32 = arith.constant 0 : i32
    %c0_i32_0 = arith.constant 0 : i32
    %c0_i32_1 = arith.constant 0 : i32
    return %arg0, %c0_i32, %c0_i32_0 : i32, i32, i32
  }
}

</mosaic_0001>

<llo_original>
// kernel: tpu_custom_call.1
$region0: #{tpu_custom_call.1}
  #allocation0 [shape = 'u32[]', space=smem, size = 0x4, offset = 0x4, fixed_abs, tag = 'smem constant byte address 0x4 - core index']
  #allocation1 [shape = 'u32[144,128]{1,0:T(1,128)}', space=vmem, size = 0x12000, scoped, tag = 'internal scratch']
  %s0 = inlined_call_operand.vmem [shape: f32[2,32,256], index: 0, kind: input, shape index: {}]
  %s1 = inlined_call_operand.vmem [shape: f32[64,32], index: 1, kind: input, shape index: {}]
  %s2 = inlined_call_operand.hbm [shape: f32[32,64], index: 2, kind: input, shape index: {}]
  %s3 = inlined_call_operand.vmem [shape: f32[32,1], index: 3, kind: input, shape index: {}]
  %s4 = inlined_call_operand.hbm [shape: f32[2,32,256], index: 4, kind: output, shape index: {}]
  %s5 = sld [smem:[#allocation0]]
  $region53: #{tpu_custom_call.1} parent=0
    _
  %s7 = ssub.s32 1, %s5
  %s8 = scalar_select 0, %s7, %s5
  $region1: #{tpu_custom_call.1} parent=0
    #allocation2 [shape = 'u8[16384]{0}', space=vmem, size = 0x4000, scoped, tag = 'input window, operand 2, single buffered']
    #allocation3 [shape = 's32[2]{0}', space=sflag, size = 0x8, scoped, tag = 'scoped memory for tpu_custom_call.1']
    #allocation4 [shape = 's32[2]{0}', space=sflag, size = 0x8, scoped, tag = 'scoped memory for tpu_custom_call.1']
    #allocation5 [shape = 'u8[65536]{0}', space=vmem, size = 0x10000, scoped, tag = 'output window, operand 0']
    %9 = vsyncpa [#allocation3], 0
    %10 = vsyncpa [#allocation4], 0
    %s11 = scalar_lea.sflag [#allocation4], 1
    %12 = vsyncpa %s11, 0
    loop: start=0, step=1, limit=4
    $region2: #{tpu_custom_call.1} parent=1 // loop_pre_header
      _
    $region3: #{tpu_custom_call.1} parent=1 // loop_header
      %s14 = sphi 0, %s18
      %p15 = scmp.ge.s32.totalorder %s14, 4
      %s24 = sphi 0, %s26
      %s27 = sphi 0, %s24
      %s28 = sphi 0, %s27
      %s44 = sphi 0, %s28
      %s48 = sphi 0, %s48
      %s50 = sphi 0, %s48
      %s51 = sphi 0, %s50
      %s65 = sphi 0, %s51
      %s69 = sphi 0, %s69
      %s71 = sphi 0, %s69
      %s72 = sphi 0, %s71
      %s86 = sphi 0, %s72
      %s90 = sphi 0, %s90
      %s92 = sphi 0, %s90
      %s93 = sphi 0, %s92
      %s107 = sphi 0, %s93
      %s113 = sphi 0, %s115
      %s116 = sphi 0, %s113
      %s117 = sphi 0, %s116
      %s133 = sphi 0, %s117
    $region4: #{tpu_custom_call.1} parent=1 // loop_header_branch
      %17 = sbr.rel (%p15) target = $region8
    $region5: #{tpu_custom_call.1} parent=1 // loop_body
      %s19 = ssub.s32 %s14, 1
      %s20 = ssub.s32 %s14, 2
      %s21 = sadd.s32 %s14, 1
      %s22 = ssub.s32 %s14, %s21
      %p23 = scmp.eq.s32.totalorder %s22, 0
      %s25 = sadd.s32 %s24, 1
      %s26 = scalar_select %p23, %s24, %s25
      %p29 = pneg %p23
      %p30 = scmp.eq.s32.totalorder %s14, 1
      %p31 = por %p29, %p30
      %p32 = scmp.ne.s32.totalorder %s24, %s27
      %p33 = scmp.eq.s32.totalorder %s14, 0
      %p34 = por %p32, %p33
      %p35 = scmp.ne.s32.totalorder %s24, %s27
      %p36 = scmp.eq.s32.totalorder %s19, 1
      %p37 = por %p35, %p36
      %p38 = scmp.ne.s32.totalorder %s27, %s28
      %p39 = scmp.eq.s32.totalorder %s19, 0
      %p40 = por %p38, %p39
      %p41 = scmp.ne.s32.totalorder %s27, %s28
      %p42 = scmp.eq.s32.totalorder %s20, 1
      %p43 = por %p41, %p42
      %p45 = scmp.ne.s32.totalorder %s28, %s44
      %p46 = scmp.eq.s32.totalorder %s20, 0
      %p47 = por %p45, %p46
      %s49 = sadd.s32 %s48, 1
      %p52 = scmp.eq.s32.totalorder %s14, 1
      %p53 = scmp.ne.s32.totalorder %s48, %s50
      %p54 = scmp.eq.s32.totalorder %s14, 0
      %p55 = por %p53, %p54
      %p56 = scmp.ne.s32.totalorder %s48, %s50
      %p57 = scmp.eq.s32.totalorder %s19, 1
      %p58 = por %p56, %p57
      %p59 = scmp.ne.s32.totalorder %s50, %s51
      %p60 = scmp.eq.s32.totalorder %s19, 0
      %p61 = por %p59, %p60
      %p62 = scmp.ne.s32.totalorder %s50, %s51
      %p63 = scmp.eq.s32.totalorder %s20, 1
      %p64 = por %p62, %p63
      %p66 = scmp.ne.s32.totalorder %s51, %s65
      %p67 = scmp.eq.s32.totalorder %s20, 0
      %p68 = por %p66, %p67
      %s70 = sadd.s32 %s69, 1
      %p73 = scmp.eq.s32.totalorder %s14, 1
      %p74 = scmp.ne.s32.totalorder %s69, %s71
      %p75 = scmp.eq.s32.totalorder %s14, 0
      %p76 = por %p74, %p75
      %p77 = scmp.ne.s32.totalorder %s69, %s71
      %p78 = scmp.eq.s32.totalorder %s19, 1
      %p79 = por %p77, %p78
      %p80 = scmp.ne.s32.totalorder %s71, %s72
      %p81 = scmp.eq.s32.totalorder %s19, 0
      %p82 = por %p80, %p81
      %p83 = scmp.ne.s32.totalorder %s71, %s72
      %p84 = scmp.eq.s32.totalorder %s20, 1
      %p85 = por %p83, %p84
      %p87 = scmp.ne.s32.totalorder %s72, %s86
      %p88 = scmp.eq.s32.totalorder %s20, 0
      %p89 = por %p87, %p88
      %s91 = sadd.s32 %s90, 1
      %p94 = scmp.eq.s32.totalorder %s14, 1
      %p95 = scmp.ne.s32.totalorder %s90, %s92
      %p96 = scmp.eq.s32.totalorder %s14, 0
      %p97 = por %p95, %p96
      %p98 = scmp.ne.s32.totalorder %s90, %s92
      %p99 = scmp.eq.s32.totalorder %s19, 1
      %p100 = por %p98, %p99
      %p101 = scmp.ne.s32.totalorder %s92, %s93
      %p102 = scmp.eq.s32.totalorder %s19, 0
      %p103 = por %p101, %p102
      %p104 = scmp.ne.s32.totalorder %s92, %s93
      %p105 = scmp.eq.s32.totalorder %s20, 1
      %p106 = por %p104, %p105
      %p108 = scmp.ne.s32.totalorder %s93, %s107
      %p109 = scmp.eq.s32.totalorder %s20, 0
      %p110 = por %p108, %p109
      %s111 = ssub.s32 %s14, %s21
      %p112 = scmp.eq.s32.totalorder %s111, 0
      %s114 = sadd.s32 %s113, 1
      %s115 = scalar_select %p112, %s113, %s114
      %p118 = pneg %p112
      %p119 = scmp.eq.s32.totalorder %s14, 1
      %p120 = por %p118, %p119
      %p121 = scmp.ne.s32.totalorder %s113, %s116
      %p122 = scmp.eq.s32.totalorder %s14, 0
      %p123 = por %p121, %p122
      %p124 = scmp.ne.s32.totalorder %s113, %s116
      %p125 = scmp.eq.s32.totalorder %s19, 1
      %p126 = por %p124, %p125
      %p127 = scmp.ne.s32.totalorder %s116, %s117
      %p128 = scmp.eq.s32.totalorder %s19, 0
      %p129 = por %p127, %p128
      %p130 = scmp.ne.s32.totalorder %s116, %s117
      %p131 = scmp.eq.s32.totalorder %s20, 1
      %p132 = por %p130, %p131
      %p134 = scmp.ne.s32.totalorder %s117, %s133
      %p135 = scmp.eq.s32.totalorder %s20, 0
      %p136 = por %p134, %p135
      %p137 = scmp.le.s32.totalorder 1, %s14
      %p138 = scmp.lt.s32.totalorder %s14, 3
      %p139 = pnand %p137, %p138
      %p140 = pneg %p139
      // Predicated region
      $region9: #{tpu_custom_call.1} parent=5 // pred_check
        _
      $region10: #{tpu_custom_call.1} parent=5 // pred_check_branch
        %142 = sbr.rel (%p139) target = $region12
      $region11: #{tpu_custom_call.1} parent=5 // pred_region
        %s143 = ssub.s32 %s14, 1
        // Predicated region
        $region13: #{tpu_custom_call.1} parent=11 // pred_check
          %p144 = pneg %p61
        $region14: #{tpu_custom_call.1} parent=11 // pred_check_branch
          %146 = sbr.rel (%p144) target = $region16
        $region15: #{tpu_custom_call.1} parent=11 // pred_region
          _
        $region16: #{tpu_custom_call.1} parent=11 // pred_fallthru
          _
        // Predicated region
        $region17: #{tpu_custom_call.1} parent=11 // pred_check
          %p147 = pneg %p82
        $region18: #{tpu_custom_call.1} parent=11 // pred_check_branch
          %149 = sbr.rel (%p147) target = $region20
        $region19: #{tpu_custom_call.1} parent=11 // pred_region
          %s151 = ssub.s32 512, 512
          %152 = vsyncadd [#allocation3], %s151
          %s153 = sshll.u32 [#allocation2], 4
          %s154 = int_to_ptr.vmem [resolvable:$true] %s153
          %159 = dma.hbm_to_vmem [thread:$0]  %s2, 512, %s154, [#allocation3], 128, 128, 8
        $region20: #{tpu_custom_call.1} parent=11 // pred_fallthru
          _
        // Predicated region
        $region21: #{tpu_custom_call.1} parent=11 // pred_check
          %p160 = pneg %p103
        $region22: #{tpu_custom_call.1} parent=11 // pred_check_branch
          %162 = sbr.rel (%p160) target = $region24
        $region23: #{tpu_custom_call.1} parent=11 // pred_region
          _
        $region24: #{tpu_custom_call.1} parent=11 // pred_fallthru
          _
      $region12: #{tpu_custom_call.1} parent=5 // pred_fallthru
        _
      %p163 = scmp.lt.s32.totalorder %s14, 2
      // Predicated region
      $region25: #{tpu_custom_call.1} parent=5 // pred_check
        %p164 = pneg %p163
      $region26: #{tpu_custom_call.1} parent=5 // pred_check_branch
        %166 = sbr.rel (%p164) target = $region28
      $region27: #{tpu_custom_call.1} parent=5 // pred_region
        // Predicated region
        $region29: #{tpu_custom_call.1} parent=27 // pred_check
          %p167 = pneg %p34
        $region30: #{tpu_custom_call.1} parent=27 // pred_check_branch
          %169 = sbr.rel (%p167) target = $region32
        $region31: #{tpu_custom_call.1} parent=27 // pred_region
          %p170 = scmp.lt.s32.totalorder %s14, 1
          %s171 = scalar_select %p170, %s14, 1
          %s172 = smul.addr %s171, 8
          %s173 = smul.addr %s172, 8
          %s174 = scalar_lea.vmem %s0, %s173
        $region32: #{tpu_custom_call.1} parent=27 // pred_fallthru
          _
      $region28: #{tpu_custom_call.1} parent=5 // pred_fallthru
        _
      %p175 = scmp.le.s32.totalorder 1, %s14
      %p176 = scmp.lt.s32.totalorder %s14, 3
      %p177 = pnand %p175, %p176
      %p178 = pneg %p177
      // Predicated region
      $region33: #{tpu_custom_call.1} parent=5 // pred_check
        _
      $region34: #{tpu_custom_call.1} parent=5 // pred_check_branch
        %180 = sbr.rel (%p177) target = $region36
      $region35: #{tpu_custom_call.1} parent=5 // pred_region
        %s181 = ssub.s32 %s14, 1
        // Predicated region
        $region37: #{tpu_custom_call.1} parent=35 // pred_check
          %p182 = pneg %p82
        $region38: #{tpu_custom_call.1} parent=35 // pred_check_branch
          %184 = sbr.rel (%p182) target = $region40
        $region39: #{tpu_custom_call.1} parent=35 // pred_region
          %185 = dma.done [#allocation3], 512
        $region40: #{tpu_custom_call.1} parent=35 // pred_fallthru
          _
        %p186 = scmp.lt.s32.totalorder %s19, 1
        %s187 = scalar_select %p186, %s19, 1
        %s188 = smul.addr %s187, 8
        %s189 = smul.addr %s188, 8
        %s190 = scalar_lea.vmem %s0, %s189
        %p191 = pneg %p40
        %p192 = pneg %p37
        %p193 = pneg %p61
        %p194 = pneg %p58
        %p195 = pneg %p82
        %p196 = pneg %p79
        %p197 = pneg %p103
        %p198 = pneg %p100
        %p199 = pneg %p129
        %p200 = pneg %p126
        %s201 = sand.u32 %s116, 1
        %s202 = scalar_lea.sflag [#allocation4], %s201
        %s203 = sand.u32 %s116, 1
        %s204 = smul.addr %s203, 64
        %s205 = scalar_lea.vmem [#allocation5], %s204
        %p206 = scmp.lt.s32.totalorder %s19, 1
        %s207 = scalar_select %p206, %s19, 1
        %s208 = smul.addr %s207, 8
        %s209 = smul.addr %s208, 8
        %s210 = scalar_lea.vmem %s0, %s209
        %v211 = vld [vmem:[%s1] sm:$0xff]
        %v212 = vld [vmem:[%s1 + $0x8] sm:$0xff]
        %v213 = vld [vmem:[%s1 + $0x10] sm:$0xff]
        %v214 = vld [vmem:[%s1 + $0x18] sm:$0xff]
        %v215 = vld [vmem:[%s1 + $0x20] sm:$0xff]
        %v216 = vld [vmem:[%s1 + $0x28] sm:$0xff]
        %v217 = vld [vmem:[%s1 + $0x30] sm:$0xff]
        %v218 = vld [vmem:[%s1 + $0x38] sm:$0xff]
        %v219 = vld [vmem:[#allocation2] sm:$0xff]
        %v220 = vld [vmem:[#allocation2 + $0x8] sm:$0xff]
        %v221 = vld [vmem:[#allocation2 + $0x10] sm:$0xff]
        %v222 = vld [vmem:[#allocation2 + $0x18] sm:$0xff]
        %v223 = vld [vmem:[%s3] sm:$0xff]
        %v224 = vld [vmem:[%s3 + $0x8] sm:$0xff]
        %v225 = vld [vmem:[%s3 + $0x10] sm:$0xff]
        %v226 = vld [vmem:[%s3 + $0x18] sm:$0xff]
        %v227 = vld [vmem:[%s210] sm:$0xff]
        %v228 = vld [vmem:[%s210 + $0x8] sm:$0xff]
        %v229 = vld [vmem:[%s210 + $0x10] sm:$0xff]
        %v230 = vld [vmem:[%s210 + $0x18] sm:$0xff]
        %v231 = vld [vmem:[%s210 + $0x20] sm:$0xff]
        %v232 = vld [vmem:[%s210 + $0x28] sm:$0xff]
        %v233 = vld [vmem:[%s210 + $0x30] sm:$0xff]
        %v234 = vld [vmem:[%s210 + $0x38] sm:$0xff]
        %vm235 = vcmask 261120
        %v237 = vsel %vm235, %v211, 0
        %v240 = vsel %vm235, %v212, 0
        %v243 = vsel %vm235, %v213, 0
        %v246 = vsel %vm235, %v214, 0
        %v249 = vsel %vm235, %v215, 0
        %v252 = vsel %vm235, %v216, 0
        %v255 = vsel %vm235, %v217, 0
        %v258 = vsel %vm235, %v218, 0
        %260 = vmatprep.subr.mxu0 %v228
        %261 = vmatpush1.msra.mxu0 %v227
        %262 = vmatprep.subr.mxu0 %v230
        %263 = vmatpush1.msra.mxu0 %v229
        %264 = vmatprep.subr.mxu0 %v232
        %265 = vmatpush1.msra.mxu0 %v231
        %266 = vmatprep.subr.mxu0 %v234
        %267 = vmatpush1.msra.mxu0 %v233
        %268 = vmatprep.subr.mxu0 0.0
        %269 = vmatpush1.msra.mxu0 0.0
        %270 = vmatprep.subr.mxu0 0.0
        %271 = vmatpush1.msra.mxu0 0.0
        %272 = vmatprep.subr.mxu0 0.0
        %273 = vmatpush1.msra.mxu0 0.0
        %274 = vmatprep.subr.mxu0 0.0
        %275 = vmatpush1.msra.mxu0 0.0
        %276 = vmatprep.subr.mxu0 0.0
        %277 = vmatpush1.msra.mxu0 0.0
        %278 = vmatprep.subr.mxu0 0.0
        %279 = vmatpush1.msra.mxu0 0.0
        %280 = vmatprep.subr.mxu0 0.0
        %281 = vmatpush1.msra.mxu0 0.0
        %282 = vmatprep.subr.mxu0 0.0
        %283 = vmatpush1.msra.mxu0 0.0
        %284 = vmatprep.subr.mxu0 0.0
        %285 = vmatpush1.msra.mxu0 0.0
        %286 = vmatprep.subr.mxu0 0.0
        %287 = vmatpush1.msra.mxu0 0.0
        %288 = vmatprep.subr.mxu0 0.0
        %289 = vmatpush1.msra.mxu0 0.0
        %290 = vmatprep.subr.mxu0 0.0
        %291 = vmatpush1.msra.mxu0 0.0
        %292 = vmatprep.subr.mxu0 0.0
        %293 = vmatpush1.msra.mxu0 0.0
        %294 = vmatprep.subr.mxu0 0.0
        %295 = vmatpush1.msra.mxu0 0.0
        %296 = vmatprep.subr.mxu0 0.0
        %297 = vmatpush1.msra.mxu0 0.0
        %298 = vmatprep.subr.mxu0 0.0
        %299 = vmatpush1.msra.mxu0 0.0
        %300 = vmatprep.subr.mxu0 0.0
        %301 = vmatpush1.msra.mxu0 0.0
        %302 = vmatprep.subr.mxu0 0.0
        %303 = vmatpush1.msra.mxu0 0.0
        %304 = vmatprep.subr.mxu0 0.0
        %305 = vmatpush1.msra.mxu0 0.0
        %306 = vmatprep.subr.mxu0 0.0
        %307 = vmatpush1.msra.mxu0 0.0
        %308 = vmatprep.subr.mxu0 0.0
        %309 = vmatpush1.msra.mxu0 0.0
        %310 = vmatprep.subr.mxu0 0.0
        %311 = vmatpush1.msra.mxu0 0.0
        %312 = vmatprep.subr.mxu0 0.0
        %313 = vmatpush1.msra.mxu0 0.0
        %314 = vmatprep.subr.mxu0 0.0
        %315 = vmatpush1.msra.mxu0 0.0
        %316 = vmatprep.subr.mxu0 0.0
        %317 = vmatpush1.msra.mxu0 0.0
        %318 = vmatprep.subr.mxu0 0.0
        %319 = vmatpush1.msra.mxu0 0.0
        %320 = vmatprep.subr.mxu0 0.0
        %321 = vmatpush1.msra.mxu0 0.0
        %322 = vmatprep.subr.mxu0 0.0
        %323 = vmatpush1.msra.mxu0 0.0
        %324 = vmatprep.mubr.f32.mxu0 0.0
        %325 = vmatmul.mubr.f32.gmra.mrb[0].mxu0 %v237
        %v326 = vpop.f32.mrb[0].mxu0
        %v327 = vadd.f32 0.0, %v326
        %v328 = vpop.f32.mrb[0].mxu0
        %v329 = vadd.f32 0.0, %v328
        %330 = vmatprep.mubr.f32.mxu0 0.0
        %331 = vmatmul.mubr.f32.gmra.mrb[0].mxu0 %v240
        %v332 = vpop.f32.mrb[0].mxu0
        %v333 = vadd.f32 0.0, %v332
        %v334 = vpop.f32.mrb[0].mxu0
        %v335 = vadd.f32 0.0, %v334
        %336 = vmatprep.mubr.f32.mxu0 0.0
        %337 = vmatmul.mubr.f32.gmra.mrb[0].mxu0 %v243
        %v338 = vpop.f32.mrb[0].mxu0
        %v339 = vadd.f32 0.0, %v338
        %v340 = vpop.f32.mrb[0].mxu0
        %v341 = vadd.f32 0.0, %v340
        %342 = vmatprep.mubr.f32.mxu0 0.0
        %343 = vmatmul.mubr.f32.gmra.mrb[0].mxu0 %v246
        %v344 = vpop.f32.mrb[0].mxu0
        %v345 = vadd.f32 0.0, %v344
        %v346 = vpop.f32.mrb[0].mxu0
        %v347 = vadd.f32 0.0, %v346
        %348 = vmatprep.mubr.f32.mxu0 0.0
        %349 = vmatmul.mubr.f32.gmra.mrb[0].mxu0 %v249
        %v350 = vpop.f32.mrb[0].mxu0
        %v351 = vadd.f32 0.0, %v350
        %v352 = vpop.f32.mrb[0].mxu0
        %v353 = vadd.f32 0.0, %v352
        %354 = vmatprep.mubr.f32.mxu0 0.0
        %355 = vmatmul.mubr.f32.gmra.mrb[0].mxu0 %v252
        %v356 = vpop.f32.mrb[0].mxu0
        %v357 = vadd.f32 0.0, %v356
        %v358 = vpop.f32.mrb[0].mxu0
        %v359 = vadd.f32 0.0, %v358
        %360 = vmatprep.mubr.f32.mxu0 0.0
        %361 = vmatmul.mubr.f32.gmra.mrb[0].mxu0 %v255
        %v362 = vpop.f32.mrb[0].mxu0
        %v363 = vadd.f32 0.0, %v362
        %v364 = vpop.f32.mrb[0].mxu0
        %v365 = vadd.f32 0.0, %v364
        %366 = vmatprep.mubr.f32.mxu0 0.0
        %367 = vmatmul.mubr.f32.gmra.mrb[0].mxu0 %v258
        %v368 = vpop.f32.mrb[0].mxu0
        %v369 = vadd.f32 0.0, %v368
        %v370 = vpop.f32.mrb[0].mxu0
        %v371 = vadd.f32 0.0, %v370
        %372 = vdwg.mxu0
        %v373 = vmax.f32 %v327, %v329
        %374 = vmax.xlane.f32.xlu0 %v373
        %v375 = vpop.xlane.xlu0 %374
        %v376 = vmax.f32 %v333, %v335
        %377 = vmax.xlane.f32.xlu0 %v376
        %v378 = vpop.xlane.xlu0 %377
        %v379 = vmax.f32 %v339, %v341
        %380 = vmax.xlane.f32.xlu0 %v379
        %v381 = vpop.xlane.xlu0 %380
        %v382 = vmax.f32 %v345, %v347
        %383 = vmax.xlane.f32.xlu0 %v382
        %v384 = vpop.xlane.xlu0 %383
        %v385 = vmax.f32 %v351, %v353
        %386 = vmax.xlane.f32.xlu0 %v385
        %v387 = vpop.xlane.xlu0 %386
        %v388 = vmax.f32 %v357, %v359
        %389 = vmax.xlane.f32.xlu0 %v388
        %v390 = vpop.xlane.xlu0 %389
        %v391 = vmax.f32 %v363, %v365
        %392 = vmax.xlane.f32.xlu0 %v391
        %v393 = vpop.xlane.xlu0 %392
        %v394 = vmax.f32 %v369, %v371
        %395 = vmax.xlane.f32.xlu0 %v394
        %v396 = vpop.xlane.xlu0 %395
        %v397 = vsub.f32 %v327, %v375
        %v398 = vsub.f32 %v329, %v375
        %v399 = vsub.f32 %v333, %v378
        %v400 = vsub.f32 %v335, %v378
        %v401 = vsub.f32 %v339, %v381
        %v402 = vsub.f32 %v341, %v381
        %v403 = vsub.f32 %v345, %v384
        %v404 = vsub.f32 %v347, %v384
        %v405 = vsub.f32 %v351, %v387
        %v406 = vsub.f32 %v353, %v387
        %v407 = vsub.f32 %v357, %v390
        %v408 = vsub.f32 %v359, %v390
        %v409 = vsub.f32 %v363, %v393
        %v410 = vsub.f32 %v365, %v393
        %v411 = vsub.f32 %v369, %v396
        %v412 = vsub.f32 %v371, %v396
        %v413 = vmul.f32 %v397, 1.442695
        %v414 = vpow.pop %v413
        %v415 = vmul.f32 %v398, 1.442695
        %v416 = vpow.pop %v415
        %v417 = vmul.f32 %v399, 1.442695
        %v418 = vpow.pop %v417
        %v419 = vmul.f32 %v400, 1.442695
        %v420 = vpow.pop %v419
        %v421 = vmul.f32 %v401, 1.442695
        %v422 = vpow.pop %v421
        %v423 = vmul.f32 %v402, 1.442695
        %v424 = vpow.pop %v423
        %v425 = vmul.f32 %v403, 1.442695
        %v426 = vpow.pop %v425
        %v427 = vmul.f32 %v404, 1.442695
        %v428 = vpow.pop %v427
        %v429 = vmul.f32 %v405, 1.442695
        %v430 = vpow.pop %v429
        %v431 = vmul.f32 %v406, 1.442695
        %v432 = vpow.pop %v431
        %v433 = vmul.f32 %v407, 1.442695
        %v434 = vpow.pop %v433
        %v435 = vmul.f32 %v408, 1.442695
        %v436 = vpow.pop %v435
        %v437 = vmul.f32 %v409, 1.442695
        %v438 = vpow.pop %v437
        %v439 = vmul.f32 %v410, 1.442695
        %v440 = vpow.pop %v439
        %v441 = vmul.f32 %v411, 1.442695
        %v442 = vpow.pop %v441
        %v443 = vmul.f32 %v412, 1.442695
        %v444 = vpow.pop %v443
        %v445 = vadd.f32 %v414, %v416
        %446 = vadd.xlane.f32.xlu0 %v445
        %v447 = vpop.xlane.xlu0 %446
        %v448 = vadd.f32 %v418, %v420
        %449 = vadd.xlane.f32.xlu0 %v448
        %v450 = vpop.xlane.xlu0 %449
        %v451 = vadd.f32 %v422, %v424
        %452 = vadd.xlane.f32.xlu0 %v451
        %v453 = vpop.xlane.xlu0 %452
        %v454 = vadd.f32 %v426, %v428
        %455 = vadd.xlane.f32.xlu0 %v454
        %v456 = vpop.xlane.xlu0 %455
        %v457 = vadd.f32 %v430, %v432
        %458 = vadd.xlane.f32.xlu0 %v457
        %v459 = vpop.xlane.xlu0 %458
        %v460 = vadd.f32 %v434, %v436
        %461 = vadd.xlane.f32.xlu0 %v460
        %v462 = vpop.xlane.xlu0 %461
        %v463 = vadd.f32 %v438, %v440
        %464 = vadd.xlane.f32.xlu0 %v463
        %v465 = vpop.xlane.xlu0 %464
        %v466 = vadd.f32 %v442, %v444
        %467 = vadd.xlane.f32.xlu0 %v466
        %v468 = vpop.xlane.xlu0 %467
        %v469 = vrcp.pop %v447
        %v470 = vrcp.pop %v450
        %v471 = vrcp.pop %v453
        %v472 = vrcp.pop %v456
        %v473 = vrcp.pop %v459
        %v474 = vrcp.pop %v462
        %v475 = vrcp.pop %v465
        %v476 = vrcp.pop %v468
        %v477 = vmul.f32 %v414, %v469
        %v478 = vmul.f32 %v416, %v469
        %v479 = vmul.f32 %v418, %v470
        %v480 = vmul.f32 %v420, %v470
        %v481 = vmul.f32 %v422, %v471
        %v482 = vmul.f32 %v424, %v471
        %v483 = vmul.f32 %v426, %v472
        %v484 = vmul.f32 %v428, %v472
        %v485 = vmul.f32 %v430, %v473
        %v486 = vmul.f32 %v432, %v473
        %v487 = vmul.f32 %v434, %v474
        %v488 = vmul.f32 %v436, %v474
        %v489 = vmul.f32 %v438, %v475
        %v490 = vmul.f32 %v440, %v475
        %v491 = vmul.f32 %v442, %v476
        %v492 = vmul.f32 %v444, %v476
        %v493 = vadd.f32 %v477, %v479
        %v494 = vadd.f32 %v493, %v481
        %v495 = vadd.f32 %v494, %v483
        %v496 = vadd.f32 %v495, %v485
        %v497 = vadd.f32 %v496, %v487
        %v498 = vadd.f32 %v497, %v489
        %v499 = vadd.f32 %v498, %v491
        %v500 = vrot.slane %v499, 4
        %v501 = vadd.f32 %v499, %v500
        %v502 = vrot.slane %v501, 2
        %v503 = vadd.f32 %v501, %v502
        %v504 = vrot.slane %v503, 1
        %v505 = vadd.f32 %v503, %v504
        %v506 = vadd.f32 %v478, %v480
        %v507 = vadd.f32 %v506, %v482
        %v508 = vadd.f32 %v507, %v484
        %v509 = vadd.f32 %v508, %v486
        %v510 = vadd.f32 %v509, %v488
        %v511 = vadd.f32 %v510, %v490
        %v512 = vadd.f32 %v511, %v492
        %v513 = vrot.slane %v512, 4
        %v514 = vadd.f32 %v512, %v513
        %v515 = vrot.slane %v514, 2
        %v516 = vadd.f32 %v514, %v515
        %v517 = vrot.slane %v516, 1
        %v518 = vadd.f32 %v516, %v517
        %v519 = vadd.f32 %v505, 1e-09
        %v520 = vadd.f32 %v518, 1e-09
        %v521 = vrcp.pop %v519
        %v522 = vmul.f32 %v477, %v521
        %v523 = vrcp.pop %v520
        %v524 = vmul.f32 %v478, %v523
        %v525 = vmul.f32 %v479, %v521
        %v526 = vmul.f32 %v480, %v523
        %v527 = vmul.f32 %v481, %v521
        %v528 = vmul.f32 %v482, %v523
        %v529 = vmul.f32 %v483, %v521
        %v530 = vmul.f32 %v484, %v523
        %v531 = vmul.f32 %v485, %v521
        %v532 = vmul.f32 %v486, %v523
        %v533 = vmul.f32 %v487, %v521
        %v534 = vmul.f32 %v488, %v523
        %v535 = vmul.f32 %v489, %v521
        %v536 = vmul.f32 %v490, %v523
        %v537 = vmul.f32 %v491, %v521
        %v538 = vmul.f32 %v492, %v523
        %540 = vset.pattern.permute.xlu0 0
        %541 = vperm.xlu0 %540, %v223
        %v542 = vpop.permute.xlu0 %541
        %545 = vset.pattern.permute.xlu0 0
        %546 = vperm.xlu0 %545, %v224
        %v547 = vpop.permute.xlu0 %546
        %550 = vset.pattern.permute.xlu0 0
        %551 = vperm.xlu0 %550, %v225
        %v552 = vpop.permute.xlu0 %551
        %555 = vset.pattern.permute.xlu0 0
        %556 = vperm.xlu0 %555, %v226
        %v557 = vpop.permute.xlu0 %556
        %vm559 = vcmask 523264
        %v561 = vsel %vm559, %v219, 0
        %v564 = vsel %vm559, %v220, 0
        %v567 = vsel %vm559, %v221, 0
        %v570 = vsel %vm559, %v222, 0
        %572 = vmatprep.subr.mxu0 %v524
        %573 = vmatpush1.msra.mxu0 %v522
        %574 = vmatprep.subr.mxu0 %v526
        %575 = vmatpush1.msra.mxu0 %v525
        %576 = vmatprep.subr.mxu0 %v528
        %577 = vmatpush1.msra.mxu0 %v527
        %578 = vmatprep.subr.mxu0 %v530
        %579 = vmatpush1.msra.mxu0 %v529
        %580 = vmatprep.subr.mxu0 %v532
        %581 = vmatpush1.msra.mxu0 %v531
        %582 = vmatprep.subr.mxu0 %v534
        %583 = vmatpush1.msra.mxu0 %v533
        %584 = vmatprep.subr.mxu0 %v536
        %585 = vmatpush1.msra.mxu0 %v535
        %586 = vmatprep.subr.mxu0 %v538
        %587 = vmatpush1.msra.mxu0 %v537
        %588 = vmatprep.subr.mxu0 0.0
        %589 = vmatpush1.msra.mxu0 0.0
        %590 = vmatprep.subr.mxu0 0.0
        %591 = vmatpush1.msra.mxu0 0.0
        %592 = vmatprep.subr.mxu0 0.0
        %593 = vmatpush1.msra.mxu0 0.0
        %594 = vmatprep.subr.mxu0 0.0
        %595 = vmatpush1.msra.mxu0 0.0
        %596 = vmatprep.subr.mxu0 0.0
        %597 = vmatpush1.msra.mxu0 0.0
        %598 = vmatprep.subr.mxu0 0.0
        %599 = vmatpush1.msra.mxu0 0.0
        %600 = vmatprep.subr.mxu0 0.0
        %601 = vmatpush1.msra.mxu0 0.0
        %602 = vmatprep.subr.mxu0 0.0
        %603 = vmatpush1.msra.mxu0 0.0
        %604 = vmatprep.subr.mxu0 0.0
        %605 = vmatpush1.msra.mxu0 0.0
        %606 = vmatprep.subr.mxu0 0.0
        %607 = vmatpush1.msra.mxu0 0.0
        %608 = vmatprep.subr.mxu0 0.0
        %609 = vmatpush1.msra.mxu0 0.0
        %610 = vmatprep.subr.mxu0 0.0
        %611 = vmatpush1.msra.mxu0 0.0
        %612 = vmatprep.subr.mxu0 0.0
        %613 = vmatpush1.msra.mxu0 0.0
        %614 = vmatprep.subr.mxu0 0.0
        %615 = vmatpush1.msra.mxu0 0.0
        %616 = vmatprep.subr.mxu0 0.0
        %617 = vmatpush1.msra.mxu0 0.0
        %618 = vmatprep.subr.mxu0 0.0
        %619 = vmatpush1.msra.mxu0 0.0
        %620 = vmatprep.subr.mxu0 0.0
        %621 = vmatpush1.msra.mxu0 0.0
        %622 = vmatprep.subr.mxu0 0.0
        %623 = vmatpush1.msra.mxu0 0.0
        %624 = vmatprep.subr.mxu0 0.0
        %625 = vmatpush1.msra.mxu0 0.0
        %626 = vmatprep.subr.mxu0 0.0
        %627 = vmatpush1.msra.mxu0 0.0
        %628 = vmatprep.subr.mxu0 0.0
        %629 = vmatpush1.msra.mxu0 0.0
        %630 = vmatprep.subr.mxu0 0.0
        %631 = vmatpush1.msra.mxu0 0.0
        %632 = vmatprep.subr.mxu0 0.0
        %633 = vmatpush1.msra.mxu0 0.0
        %634 = vmatprep.subr.mxu0 0.0
        %635 = vmatpush1.msra.mxu0 0.0
        %636 = vmatprep.mubr.f32.mxu0 0.0
        %637 = vmatmul.mubr.f32.gmra.mrb[0].mxu0 %v561
        %v638 = vpop.f32.mrb[0].mxu0
        %v639 = vadd.f32 %v542, %v638
        %v640 = vpop.f32.mrb[0].mxu0
        %v641 = vadd.f32 %v542, %v640
        %642 = vmatprep.mubr.f32.mxu0 0.0
        %643 = vmatmul.mubr.f32.gmra.mrb[0].mxu0 %v564
        %v644 = vpop.f32.mrb[0].mxu0
        %v645 = vadd.f32 %v547, %v644
        %v646 = vpop.f32.mrb[0].mxu0
        %v647 = vadd.f32 %v547, %v646
        %648 = vmatprep.mubr.f32.mxu0 0.0
        %649 = vmatmul.mubr.f32.gmra.mrb[0].mxu0 %v567
        %v650 = vpop.f32.mrb[0].mxu0
        %v651 = vadd.f32 %v552, %v650
        %v652 = vpop.f32.mrb[0].mxu0
        %v653 = vadd.f32 %v552, %v652
        %654 = vmatprep.mubr.f32.mxu0 0.0
        %655 = vmatmul.mubr.f32.gmra.mrb[0].mxu0 %v570
        %v656 = vpop.f32.mrb[0].mxu0
        %v657 = vadd.f32 %v557, %v656
        %v658 = vpop.f32.mrb[0].mxu0
        %v659 = vadd.f32 %v557, %v658
        %660 = vdwg.mxu0
        %v661 = vadd.f32 %v639, %v227
        %v662 = vadd.f32 %v641, %v228
        %v663 = vadd.f32 %v645, %v229
        %v664 = vadd.f32 %v647, %v230
        %v665 = vadd.f32 %v651, %v231
        %v666 = vadd.f32 %v653, %v232
        %v667 = vadd.f32 %v657, %v233
        %v668 = vadd.f32 %v659, %v234
        %v669 = vmax.f32 %v661, 0.0
        %v670 = vmax.f32 %v662, 0.0
        %v671 = vmax.f32 %v663, 0.0
        %v672 = vmax.f32 %v664, 0.0
        %v673 = vmax.f32 %v665, 0.0
        %v674 = vmax.f32 %v666, 0.0
        %v675 = vmax.f32 %v667, 0.0
        %v676 = vmax.f32 %v668, 0.0
        %677 = vst [vmem:[%s205] sm:$0xff] %v669
        %678 = vst [vmem:[%s205 + $0x8] sm:$0xff] %v670
        %679 = vst [vmem:[%s205 + $0x10] sm:$0xff] %v671
        %680 = vst [vmem:[%s205 + $0x18] sm:$0xff] %v672
        %681 = vst [vmem:[%s205 + $0x20] sm:$0xff] %v673
        %682 = vst [vmem:[%s205 + $0x28] sm:$0xff] %v674
        %683 = vst [vmem:[%s205 + $0x30] sm:$0xff] %v675
        %684 = vst [vmem:[%s205 + $0x38] sm:$0xff] %v676
        %s685 = sand.u32 %s116, 1
        %s686 = scalar_lea.sflag [#allocation4], %s685
        %s687 = sand.u32 %s116, 1
        %s688 = smul.addr %s687, 64
        %s689 = scalar_lea.vmem [#allocation5], %s688
        // Predicated region
        $region41: #{tpu_custom_call.1} parent=35 // pred_check
          %p690 = pneg %p126
        $region42: #{tpu_custom_call.1} parent=35 // pred_check_branch
          %692 = sbr.rel (%p690) target = $region44
        $region43: #{tpu_custom_call.1} parent=35 // pred_region
          %s694 = ssub.s32 1024, 1024
          %695 = vsyncadd %s686, %s694
          %s696 = smul.addr %s19, 8
          %s697 = smul.addr %s696, 128
          %s698 = scalar_lea.hbm %s4, %s697
          %s699 = sshll.u32 %s689, 4
          %s700 = int_to_ptr.vmem [resolvable:$true] %s699
          %705 = dma.vmem_to_hbm [thread:$0]  %s700, 1024, %s698, %s686, 256, 256, 16
        $region44: #{tpu_custom_call.1} parent=35 // pred_fallthru
          _
      $region36: #{tpu_custom_call.1} parent=5 // pred_fallthru
        _
      %p706 = scmp.le.s32.totalorder 2, %s14
      // Predicated region
      $region45: #{tpu_custom_call.1} parent=5 // pred_check
        %p707 = pneg %p706
      $region46: #{tpu_custom_call.1} parent=5 // pred_check_branch
        %709 = sbr.rel (%p707) target = $region48
      $region47: #{tpu_custom_call.1} parent=5 // pred_region
        %s710 = ssub.s32 %s14, 2
        // Predicated region
        $region49: #{tpu_custom_call.1} parent=47 // pred_check
          %p711 = pneg %p132
        $region50: #{tpu_custom_call.1} parent=47 // pred_check_branch
          %713 = sbr.rel (%p711) target = $region52
        $region51: #{tpu_custom_call.1} parent=47 // pred_region
          %s714 = sand.u32 %s117, 1
          %s715 = scalar_lea.sflag [#allocation4], %s714
          %s716 = sand.u32 %s117, 1
          %s717 = smul.addr %s716, 64
          %s718 = scalar_lea.vmem [#allocation5], %s717
          %719 = dma.done %s715, 1024
        $region52: #{tpu_custom_call.1} parent=47 // pred_fallthru
          _
      $region48: #{tpu_custom_call.1} parent=5 // pred_fallthru
        _
    $region6: #{tpu_custom_call.1} parent=1 // loop_footer
      %s18 = sadd.s32 1, %s14
    $region7: #{tpu_custom_call.1} parent=1 // loop_footer_branch
      %13 = sbr.rel target = $region3
    $region8: #{tpu_custom_call.1} parent=1 // loop_exit
      _
    %720 = vsyncpa [#allocation3], 1
    %s721 = scalar_lea.sflag [#allocation3], 1
    %722 = vsyncpa %s721, 1
    %723 = vsyncpa [#allocation4], 1
    %s724 = scalar_lea.sflag [#allocation4], 1
    %725 = vsyncpa %s724, 1

</llo_original>
